<compile_context>
chip_gen: v6e
topology: v6e:2x2x1
jax: 0.10.0
libtpu: 0.0.40
codegen_flags: <defaults>
</compile_context>

<pallas_src>
import functools

import jax
import jax.numpy as jnp
from jax import lax
from jax.experimental import pallas as pl
from jax.experimental.pallas import tpu as pltpu

EPS = 1e-7
OUT_LANES = 128  # lane-padded per-batch output: [VEL_b, FC_vel_b, FC_hgt_b, 0, ...]


def _elem_loss0(d, loss_type):
    """Elementwise loss as a function of the (already computed) difference."""
    if loss_type == "l2":
        return d * d
    if loss_type == "l1":
        return jnp.abs(d)
    if loss_type == "l1_smooth":
        ad = jnp.abs(d)
        return jnp.where(ad < 1.0, 0.5 * d * d, ad - 0.5)
    raise ValueError(f"unknown recons_loss {loss_type!r}")


def _geom_loss_kernel(pred_ref, tgt_ref, feet_ref, cm_ref, par_ref, out_ref,
                      *, loss_type, nb_markers):
    D = nb_markers * 3

    # ---------- VEL term (marker velocity reconstruction) ----------
    p = pred_ref[...].astype(jnp.float32)             # (Bb, T, F) native -> f32
    t = tgt_ref[...].astype(jnp.float32)
    F = p.shape[-1]
    lane = lax.broadcasted_iota(jnp.int32, (1, 1, F), 2)
    # diff once (pv - tv == (p - t)[1:] - (p - t)[:-1]); mask extra feature lanes.
    e = jnp.where(lane < D, p - t, 0.0)                # (Bb, T, F)
    ev = e[:, 1:, :] - e[:, :-1, :]                    # (Bb, T-1, F)
    vel_t = jnp.sum(_elem_loss0(ev, loss_type), axis=-1, keepdims=True) * (1.0 / D)

    cm = cm_ref[...]                                   # (Bb, T-1, 7)
    contact = cm[:, :, 0:6]                            # (Bb, T-1, 6)
    m = cm[:, :, 6:7]                                  # mask[:, 1:]  (Bb, T-1, 1)
    inv_m = pl.reciprocal(jnp.sum(m, axis=1, keepdims=True) + EPS, approx=False)
    vel_b = jnp.sum(vel_t * m, axis=1, keepdims=True) * inv_m       # (Bb, 1, 1)

    # ---------- feet-contact terms ----------
    feet = feet_ref[...].astype(jnp.float32)           # (Bb, T, 18) [x|y|z planes]
    dfeet = feet[:, 1:, :] - feet[:, :-1, :]           # (Bb, T-1, 18)
    dfl = _elem_loss0(dfeet, loss_type)                # one 18-lane pass
    fv_loss = (dfl[:, :, 0:6] + dfl[:, :, 6:12] + dfl[:, :, 12:18]) * (1.0 / 3.0)

    inv_c = pl.reciprocal(jnp.sum(contact, axis=-1, keepdims=True) + EPS,
                          approx=False)                # (Bb, T-1, 1)
    fcv_t = jnp.sum(fv_loss * contact, axis=-1, keepdims=True) * inv_c
    fcv_b = jnp.sum(fcv_t * m, axis=1, keepdims=True) * inv_m       # (Bb, 1, 1)

    # feet height: z-row of the rigid transform applied to the feet markers.
    par = par_ref[...]                                 # (Bb, 1, 25)
    coef = par[:, :, 0:18]                             # r2 repeated per xyz plane
    thresh = par[:, :, 18:24]                          # (Bb, 1, 6)
    tz = par[:, :, 24:25]                              # (Bb, 1, 1)
    fh = feet[:, :-1, :] * coef                        # (Bb, T-1, 18)
    feet_h = fh[:, :, 0:6] + fh[:, :, 6:12] + fh[:, :, 12:18] + tz  # (Bb, T-1, 6)
    fh_loss = _elem_loss0(feet_h - thresh, loss_type)
    fch_t = jnp.sum(fh_loss * contact, axis=-1, keepdims=True) * inv_c
    fch_b = jnp.sum(fch_t * m, axis=1, keepdims=True) * inv_m       # (Bb, 1, 1)

    # Lane-padded per-batch output; timestep-mask batch mix happens in JAX.
    lane_o = lax.broadcasted_iota(jnp.int32, (1, 1, OUT_LANES), 2)
    out_ref[...] = (jnp.where(lane_o == 0, vel_b, 0.0)
                    + jnp.where(lane_o == 1, fcv_b, 0.0)
                    + jnp.where(lane_o == 2, fch_b, 0.0))


def _pick_block_b(B, T, F, itemsize):
    """Batch elements per grid step: fit a ~24 MiB double-buffered VMEM budget,
    cap at 8, and keep >=2 grid steps so v7x can shard the batch across TCs."""
    def pad(n, m):
        return -(-n // m) * m
    per_elem = 2 * (                                   # x2: double-buffered
        2 * pad(T, 8) * pad(F, 128) * itemsize         # pred + tgt (native dtype)
        + pad(T, 8) * 128 * 4                          # feet (18 lanes, f32)
        + pad(T - 1, 8) * 128 * 4                      # contact|mask (f32)
        + 2 * 8 * 128 * 4                              # params + per-batch output
    )
    bb = max(1, (24 * 1024 * 1024) // max(per_elem, 1))
    bb = int(min(bb, 8, B))
    if B >= 2:
        bb = min(bb, (B + 1) // 2)
    return max(1, int(bb))


def _geometric_loss_pallas(pred, tgt, feet, cm, params, *, loss_type, nb_markers):
    B, T, F = pred.shape
    Tm1 = T - 1
    bb = _pick_block_b(B, T, F, pred.dtype.itemsize)
    return pl.pallas_call(
        functools.partial(_geom_loss_kernel, loss_type=loss_type,
                          nb_markers=nb_markers),
        out_shape=jax.ShapeDtypeStruct((B, 1, OUT_LANES), jnp.float32),
        grid_spec=pltpu.PrefetchScalarGridSpec(
            num_scalar_prefetch=0,
            grid=(pl.cdiv(B, bb),),
            in_specs=[
                pl.BlockSpec((bb, T, F), lambda i: (i, 0, 0)),     # motion_pred
                pl.BlockSpec((bb, T, F), lambda i: (i, 0, 0)),     # motion_gt
                pl.BlockSpec((bb, T, 18), lambda i: (i, 0, 0)),    # feet xyz planes
                pl.BlockSpec((bb, Tm1, 7), lambda i: (i, 0, 0)),   # contact | mask
                pl.BlockSpec((bb, 1, 25), lambda i: (i, 0, 0)),    # r2-coef|thr|tz
            ],
            out_specs=pl.BlockSpec((bb, 1, OUT_LANES), lambda i: (i, 0, 0)),
        ),
        compiler_params=pltpu.CompilerParams(
            dimension_semantics=("parallel",),
            vmem_limit_bytes=48 * 1024 * 1024),
    )(pred, tgt, feet, cm, params)


class GeometricLoss:
    """JAX/Pallas port of HHInter GeometricLoss (training forward path)."""

    def __init__(self, recons_loss, nb_markers, name, train_phase_two=False):
        assert recons_loss in ("l1", "l2", "l1_smooth")
        self.recons_loss = recons_loss
        self.nb_markers = nb_markers
        self.name = name
        self.train_phase_two = train_phase_two
        self.fids = [47, 60, 55, 16, 30, 25]
        self.weights = {"VEL": 30, "FC": 30}
        self.losses = {}

    def forward(self, motion_pred, motion_gt, mask, timestep_mask, motion_R,
                motion_T, motion_feet, feet_height_thresh, is_eval=False):
        if is_eval:
            # TODO(synk): forward_contact_eval (is_eval=True) metrics not ported.
            raise NotImplementedError("eval path not ported to Pallas")

        B, T = motion_pred.shape[:2]
        M = self.nb_markers

        # --- tiny glue (all <=18-lane arrays); the two big motion tensors are
        # passed to the kernel uncopied, in their native dtype. ---
        fids = jnp.asarray(self.fids, dtype=jnp.int32)
        flat_idx = jnp.concatenate([fids * 3 + c for c in range(3)])      # (18,)
        feet = jnp.take(motion_pred, flat_idx, axis=-1).astype(jnp.float32)  # (B,T,18)

        contact = motion_feet[:, 1:-1].astype(jnp.float32)                # (B,T-1,6)
        mask1 = mask[:, 1:].astype(jnp.float32).reshape(B, T - 1, 1)
        cm = jnp.concatenate([contact, mask1], axis=-1)                   # (B,T-1,7)

        r2 = motion_R[:, 2, :].astype(jnp.float32)                        # (B,3)
        coef = jnp.repeat(r2, 6, axis=-1)                                 # (B,18)
        thresh = feet_height_thresh.astype(jnp.float32).reshape(B, 6)
        tz = motion_T[:, 0, 2].astype(jnp.float32).reshape(B, 1)
        params = jnp.concatenate([coef, thresh, tz], axis=-1).reshape(B, 1, 25)

        per_b = _geometric_loss_pallas(motion_pred, motion_gt, feet, cm, params,
                                       loss_type=self.recons_loss, nb_markers=M)
        vel_b = per_b[:, 0, 0]        # (B,)
        fcv_b = per_b[:, 0, 1]
        fch_b = per_b[:, 0, 2]

        # Final batch mix (tiny) in plain JAX so the batch grid axis stays parallel.
        bm = timestep_mask.astype(jnp.float32).reshape(B)
        inv_bm = 1.0 / (bm.sum(axis=0) + EPS)

        self.losses = {}
        self.losses["VEL_" + self.name] = (
            (vel_b * bm).sum(axis=0) * inv_bm * self.weights["VEL"])
        if self.train_phase_two:
            self.losses["FC_vel_" + self.name] = (
                (fcv_b * bm).sum(axis=0) * inv_bm * self.weights["FC"])
            self.losses["FC_hgt_" + self.name] = (
                (fch_b * bm).sum(axis=0) * inv_bm * self.weights["FC"])
        self.accum_loss()
        return self.losses

    def accum_loss(self):
        loss = 0
        for term in list(self.losses.keys()):
            loss = loss + self.losses[term]
        self.losses[self.name] = loss
        return loss


# ----------------------------- pure-JAX reference -----------------------------
def _reference_losses(motion_pred, motion_gt, mask, timestep_mask, motion_R,
                      motion_T, motion_feet, feet_height_thresh, *,
                      nb_markers, fids, loss_type, weights):
    B, T = motion_pred.shape[:2]
    M = nb_markers

    def elem(a, b):
        return _elem_loss0(a - b, loss_type)

    def mix(prediction, target, msk, batch_mask, contact_mask=None):
        loss = elem(prediction, target).mean(axis=-1, keepdims=True)
        if contact_mask is not None:
            loss = ((loss[..., 0] * contact_mask).sum(axis=-1, keepdims=True)
                    / (contact_mask.sum(axis=-1, keepdims=True) + EPS))
        loss = (loss * msk).sum(axis=(-1, -2)) / (msk.sum(axis=(-1, -2)) + EPS)
        loss = (loss * batch_mask).sum(axis=0) / (batch_mask.sum(axis=0) + EPS)
        return loss

    pred = motion_pred[..., :M * 3].reshape(B, T, M, 3).astype(jnp.float32)
    tgt = motion_gt[..., :M * 3].reshape(B, T, M, 3).astype(jnp.float32)
    msk = mask.astype(jnp.float32)
    bm = timestep_mask.astype(jnp.float32)

    out = {}
    pred_vel = (pred[:, 1:] - pred[:, :-1]).reshape(B, T - 1, M * 3)
    tgt_vel = (tgt[:, 1:] - tgt[:, :-1]).reshape(B, T - 1, M * 3)
    out["VEL"] = mix(pred_vel, tgt_vel, msk[:, 1:], bm) * weights["VEL"]

    fids_a = jnp.asarray(fids)
    feet_vel = pred[:, 1:, fids_a, :] - pred[:, :-1, fids_a, :]        # (B,T-1,6,3)
    feet_h = (jnp.einsum("bij,btpj->btpi", motion_R.astype(jnp.float32), pred)
              + motion_T.astype(jnp.float32)[:, None, :, :])
    feet_h = feet_h[:, :-1, fids_a, 2][..., None]                      # (B,T-1,6,1)
    contact = motion_feet[:, 1:-1].astype(jnp.float32)
    out["FC_vel"] = mix(feet_vel, jnp.zeros_like(feet_vel), msk[:, 1:], bm,
                        contact) * weights["FC"]
    tgt_h = (jnp.ones_like(feet_h)
             * feet_height_thresh.astype(jnp.float32)[:, None, :, None])
    out["FC_hgt"] = mix(feet_h, tgt_h, msk[:, 1:], bm, contact) * weights["FC"]
    out["total"] = out["VEL"] + out["FC_vel"] + out["FC_hgt"]
    return out


if __name__ == "__main__":
    key = jax.random.PRNGKey(0)
    B, T, M = 2, 8, 67
    F = M * 3 + 2  # extra trailing features exercise the in-kernel lane mask
    ks = jax.random.split(key, 8)

    motion_pred = 0.1 * jax.random.normal(ks[0], (B, T, F), jnp.float32)
    motion_gt = motion_pred + 0.05 * jax.random.normal(ks[1], (B, T, F), jnp.float32)
    mask = (jax.random.uniform(ks[2], (B, T, 1)) > 0.2).astype(jnp.float32)
    mask = mask.at[:, 1].set(1.0)                       # at least one active frame
    timestep_mask = (jax.random.uniform(ks[3], (B,)) > 0.2).astype(jnp.float32)
    timestep_mask = timestep_mask.at[0].set(1.0)        # at least one active batch
    motion_R = jax.random.normal(ks[4], (B, 3, 3), jnp.float32)
    motion_T = 0.1 * jax.random.normal(ks[5], (B, 1, 3), jnp.float32)
    motion_feet = (jax.random.uniform(ks[6], (B, T + 1, 6)) > 0.5).astype(jnp.float32)
    feet_height_thresh = 0.05 + 0.01 * jax.random.uniform(ks[7], (B, 6), jnp.float32)

    loss_mod = GeometricLoss("l2", M, "marker", train_phase_two=True)
    losses = loss_mod.forward(motion_pred, motion_gt, mask, timestep_mask,
                              motion_R, motion_T, motion_feet,
                              feet_height_thresh)
    total = jax.block_until_ready(losses["marker"])

    ref = _reference_losses(motion_pred, motion_gt, mask, timestep_mask,
                            motion_R, motion_T, motion_feet,
                            feet_height_thresh, nb_markers=M,
                            fids=loss_mod.fids, loss_type="l2",
                            weights=loss_mod.weights)
    ref = jax.block_until_ready(ref)

    checks = [
        (losses["VEL_marker"], ref["VEL"]),
        (losses["FC_vel_marker"], ref["FC_vel"]),
        (losses["FC_hgt_marker"], ref["FC_hgt"]),
        (total, ref["total"]),
    ]
    for got, want in checks:
        assert bool(jnp.isfinite(got)), "kernel produced non-finite loss"
        assert bool(jnp.allclose(got, want, rtol=1e-4, atol=1e-6)), (got, want)
    print("KERNEL_OK")
</pallas_src>

<mosaic_0001>
module attributes {stable_mosaic.version = 11 : i64} {
  func.func @_geom_loss_kernel(%arg0: i32, %arg1: memref<1x8x203xf32, #tpu.memory_space<vmem>>, %arg2: memref<1x8x203xf32, #tpu.memory_space<vmem>>, %arg3: memref<1x8x18xf32, #tpu.memory_space<vmem>>, %arg4: memref<1x7x7xf32, #tpu.memory_space<vmem>>, %arg5: memref<1x1x25xf32, #tpu.memory_space<vmem>>, %arg6: memref<1x1x128xf32, #tpu.memory_space<vmem>>) attributes {dimension_semantics = [#tpu.dimension_semantics<parallel>], iteration_bounds = array<i64: 2>, scalar_prefetch = 0 : i64, scratch_operands = 0 : i64, tpu.core_type = #tpu.core_type<tc>, window_params = [{transform_indices = @transform_0, window_bounds = array<i64: 1, 8, 203>}, {transform_indices = @transform_1, window_bounds = array<i64: 1, 8, 203>}, {transform_indices = @transform_2, window_bounds = array<i64: 1, 8, 18>}, {transform_indices = @transform_3, window_bounds = array<i64: 1, 7, 7>}, {transform_indices = @transform_4, window_bounds = array<i64: 1, 1, 25>}, {transform_indices = @transform_5, window_bounds = array<i64: 1, 1, 128>}]} {
    %c0 = arith.constant 0 : index
    %c0_0 = arith.constant 0 : index
    %c0_1 = arith.constant 0 : index
    %0 = vector.load %arg1[%c0, %c0_0, %c0_1] : memref<1x8x203xf32, #tpu.memory_space<vmem>>, vector<1x8x203xf32>
    %c0_2 = arith.constant 0 : index
    %c0_3 = arith.constant 0 : index
    %c0_4 = arith.constant 0 : index
    %1 = vector.load %arg2[%c0_2, %c0_3, %c0_4] : memref<1x8x203xf32, #tpu.memory_space<vmem>>, vector<1x8x203xf32>
    %2 = tpu.iota {dimensions = array<i32: 2>} : vector<1x1x203xi32>
    %c201_i32 = arith.constant 201 : i32
    %3 = vector.broadcast %c201_i32 : i32 to vector<1x1x203xi32>
    %4 = arith.cmpi slt, %2, %3 : vector<1x1x203xi32>
    %5 = arith.subf %0, %1 : vector<1x8x203xf32>
    %cst = arith.constant 0.000000e+00 : f32
    %6 = vector.shape_cast %4 : vector<1x1x203xi1> to vector<1x1x203xi1>
    %7 = vector.broadcast %6 : vector<1x1x203xi1> to vector<1x8x203xi1>
    %8 = vector.broadcast %cst : f32 to vector<1x8x203xf32>
    %9 = arith.select %7, %5, %8 : vector<1x8x203xi1>, vector<1x8x203xf32>
    %10 = vector.extract_strided_slice %9 {offsets = [0, 1, 0], sizes = [1, 7, 203], strides = [1, 1, 1]} : vector<1x8x203xf32> to vector<1x7x203xf32>
    %11 = vector.extract_strided_slice %9 {offsets = [0, 0, 0], sizes = [1, 7, 203], strides = [1, 1, 1]} : vector<1x8x203xf32> to vector<1x7x203xf32>
    %12 = arith.subf %10, %11 : vector<1x7x203xf32>
    %13 = arith.mulf %12, %12 : vector<1x7x203xf32>
    %cst_5 = arith.constant dense<0.000000e+00> : vector<1x7xf32>
    %14 = vector.multi_reduction <add>, %13, %cst_5 [2] : vector<1x7x203xf32> to vector<1x7xf32>
    %15 = vector.shape_cast %14 : vector<1x7xf32> to vector<1x7x1xf32>
    %cst_6 = arith.constant 0.00497512426 : f32
    %16 = vector.broadcast %cst_6 : f32 to vector<1x7x1xf32>
    %17 = arith.mulf %15, %16 : vector<1x7x1xf32>
    %c0_7 = arith.constant 0 : index
    %c0_8 = arith.constant 0 : index
    %c0_9 = arith.constant 0 : index
    %18 = vector.load %arg4[%c0_7, %c0_8, %c0_9] : memref<1x7x7xf32, #tpu.memory_space<vmem>>, vector<1x7x7xf32>
    %19 = vector.extract_strided_slice %18 {offsets = [0, 0, 0], sizes = [1, 7, 6], strides = [1, 1, 1]} : vector<1x7x7xf32> to vector<1x7x6xf32>
    %20 = vector.extract_strided_slice %18 {offsets = [0, 0, 6], sizes = [1, 7, 1], strides = [1, 1, 1]} : vector<1x7x7xf32> to vector<1x7x1xf32>
    %cst_10 = arith.constant dense<0.000000e+00> : vector<1x1xf32>
    %21 = vector.multi_reduction <add>, %20, %cst_10 [1] : vector<1x7x1xf32> to vector<1x1xf32>
    %22 = vector.shape_cast %21 : vector<1x1xf32> to vector<1x1x1xf32>
    %cst_11 = arith.constant 1.000000e-07 : f32
    %23 = vector.broadcast %cst_11 : f32 to vector<1x1x1xf32>
    %24 = arith.addf %22, %23 : vector<1x1x1xf32>
    %25 = tpu.reciprocal %24 : vector<1x1x1xf32> -> vector<1x1x1xf32>
    %26 = arith.mulf %17, %20 : vector<1x7x1xf32>
    %cst_12 = arith.constant dense<0.000000e+00> : vector<1x1xf32>
    %27 = vector.multi_reduction <add>, %26, %cst_12 [1] : vector<1x7x1xf32> to vector<1x1xf32>
    %28 = vector.shape_cast %27 : vector<1x1xf32> to vector<1x1x1xf32>
    %29 = arith.mulf %28, %25 : vector<1x1x1xf32>
    %c0_13 = arith.constant 0 : index
    %c0_14 = arith.constant 0 : index
    %c0_15 = arith.constant 0 : index
    %30 = vector.load %arg3[%c0_13, %c0_14, %c0_15] : memref<1x8x18xf32, #tpu.memory_space<vmem>>, vector<1x8x18xf32>
    %31 = vector.extract_strided_slice %30 {offsets = [0, 1, 0], sizes = [1, 7, 18], strides = [1, 1, 1]} : vector<1x8x18xf32> to vector<1x7x18xf32>
    %32 = vector.extract_strided_slice %30 {offsets = [0, 0, 0], sizes = [1, 7, 18], strides = [1, 1, 1]} : vector<1x8x18xf32> to vector<1x7x18xf32>
    %33 = arith.subf %31, %32 : vector<1x7x18xf32>
    %34 = arith.mulf %33, %33 : vector<1x7x18xf32>
    %35 = vector.extract_strided_slice %34 {offsets = [0, 0, 0], sizes = [1, 7, 6], strides = [1, 1, 1]} : vector<1x7x18xf32> to vector<1x7x6xf32>
    %36 = vector.extract_strided_slice %34 {offsets = [0, 0, 6], sizes = [1, 7, 6], strides = [1, 1, 1]} : vector<1x7x18xf32> to vector<1x7x6xf32>
    %37 = arith.addf %35, %36 : vector<1x7x6xf32>
    %38 = vector.extract_strided_slice %34 {offsets = [0, 0, 12], sizes = [1, 7, 6], strides = [1, 1, 1]} : vector<1x7x18xf32> to vector<1x7x6xf32>
    %39 = arith.addf %37, %38 : vector<1x7x6xf32>
    %cst_16 = arith.constant 0.333333343 : f32
    %40 = vector.broadcast %cst_16 : f32 to vector<1x7x6xf32>
    %41 = arith.mulf %39, %40 : vector<1x7x6xf32>
    %cst_17 = arith.constant dense<0.000000e+00> : vector<1x7xf32>
    %42 = vector.multi_reduction <add>, %19, %cst_17 [2] : vector<1x7x6xf32> to vector<1x7xf32>
    %43 = vector.shape_cast %42 : vector<1x7xf32> to vector<1x7x1xf32>
    %cst_18 = arith.constant 1.000000e-07 : f32
    %44 = vector.broadcast %cst_18 : f32 to vector<1x7x1xf32>
    %45 = arith.addf %43, %44 : vector<1x7x1xf32>
    %46 = tpu.reciprocal %45 : vector<1x7x1xf32> -> vector<1x7x1xf32>
    %47 = arith.mulf %41, %19 : vector<1x7x6xf32>
    %cst_19 = arith.constant dense<0.000000e+00> : vector<1x7xf32>
    %48 = vector.multi_reduction <add>, %47, %cst_19 [2] : vector<1x7x6xf32> to vector<1x7xf32>
    %49 = vector.shape_cast %48 : vector<1x7xf32> to vector<1x7x1xf32>
    %50 = arith.mulf %49, %46 : vector<1x7x1xf32>
    %51 = arith.mulf %50, %20 : vector<1x7x1xf32>
    %cst_20 = arith.constant dense<0.000000e+00> : vector<1x1xf32>
    %52 = vector.multi_reduction <add>, %51, %cst_20 [1] : vector<1x7x1xf32> to vector<1x1xf32>
    %53 = vector.shape_cast %52 : vector<1x1xf32> to vector<1x1x1xf32>
    %54 = arith.mulf %53, %25 : vector<1x1x1xf32>
    %c0_21 = arith.constant 0 : index
    %c0_22 = arith.constant 0 : index
    %c0_23 = arith.constant 0 : index
    %55 = vector.load %arg5[%c0_21, %c0_22, %c0_23] : memref<1x1x25xf32, #tpu.memory_space<vmem>>, vector<1x1x25xf32>
    %56 = vector.extract_strided_slice %55 {offsets = [0, 0, 0], sizes = [1, 1, 18], strides = [1, 1, 1]} : vector<1x1x25xf32> to vector<1x1x18xf32>
    %57 = vector.extract_strided_slice %55 {offsets = [0, 0, 18], sizes = [1, 1, 6], strides = [1, 1, 1]} : vector<1x1x25xf32> to vector<1x1x6xf32>
    %58 = vector.extract_strided_slice %55 {offsets = [0, 0, 24], sizes = [1, 1, 1], strides = [1, 1, 1]} : vector<1x1x25xf32> to vector<1x1x1xf32>
    %59 = vector.extract_strided_slice %30 {offsets = [0, 0, 0], sizes = [1, 7, 18], strides = [1, 1, 1]} : vector<1x8x18xf32> to vector<1x7x18xf32>
    %60 = vector.broadcast %56 : vector<1x1x18xf32> to vector<1x7x18xf32>
    %61 = arith.mulf %59, %60 : vector<1x7x18xf32>
    %62 = vector.extract_strided_slice %61 {offsets = [0, 0, 0], sizes = [1, 7, 6], strides = [1, 1, 1]} : vector<1x7x18xf32> to vector<1x7x6xf32>
    %63 = vector.extract_strided_slice %61 {offsets = [0, 0, 6], sizes = [1, 7, 6], strides = [1, 1, 1]} : vector<1x7x18xf32> to vector<1x7x6xf32>
    %64 = arith.addf %62, %63 : vector<1x7x6xf32>
    %65 = vector.extract_strided_slice %61 {offsets = [0, 0, 12], sizes = [1, 7, 6], strides = [1, 1, 1]} : vector<1x7x18xf32> to vector<1x7x6xf32>
    %66 = arith.addf %64, %65 : vector<1x7x6xf32>
    %67 = vector.broadcast %58 : vector<1x1x1xf32> to vector<1x7x6xf32>
    %68 = arith.addf %66, %67 : vector<1x7x6xf32>
    %69 = vector.broadcast %57 : vector<1x1x6xf32> to vector<1x7x6xf32>
    %70 = arith.subf %68, %69 : vector<1x7x6xf32>
    %71 = arith.mulf %70, %70 : vector<1x7x6xf32>
    %72 = arith.mulf %71, %19 : vector<1x7x6xf32>
    %cst_24 = arith.constant dense<0.000000e+00> : vector<1x7xf32>
    %73 = vector.multi_reduction <add>, %72, %cst_24 [2] : vector<1x7x6xf32> to vector<1x7xf32>
    %74 = vector.shape_cast %73 : vector<1x7xf32> to vector<1x7x1xf32>
    %75 = arith.mulf %74, %46 : vector<1x7x1xf32>
    %76 = arith.mulf %75, %20 : vector<1x7x1xf32>
    %cst_25 = arith.constant dense<0.000000e+00> : vector<1x1xf32>
    %77 = vector.multi_reduction <add>, %76, %cst_25 [1] : vector<1x7x1xf32> to vector<1x1xf32>
    %78 = vector.shape_cast %77 : vector<1x1xf32> to vector<1x1x1xf32>
    %79 = arith.mulf %78, %25 : vector<1x1x1xf32>
    %80 = tpu.iota {dimensions = array<i32: 2>} : vector<1x1x128xi32>
    %c0_i32 = arith.constant 0 : i32
    %81 = vector.broadcast %c0_i32 : i32 to vector<1x1x128xi32>
    %82 = arith.cmpi eq, %80, %81 : vector<1x1x128xi32>
    %cst_26 = arith.constant 0.000000e+00 : f32
    %83 = vector.shape_cast %29 : vector<1x1x1xf32> to vector<1x1x1xf32>
    %84 = vector.broadcast %83 : vector<1x1x1xf32> to vector<1x1x128xf32>
    %85 = vector.broadcast %cst_26 : f32 to vector<1x1x128xf32>
    %86 = arith.select %82, %84, %85 : vector<1x1x128xi1>, vector<1x1x128xf32>
    %c1_i32 = arith.constant 1 : i32
    %87 = vector.broadcast %c1_i32 : i32 to vector<1x1x128xi32>
    %88 = arith.cmpi eq, %80, %87 : vector<1x1x128xi32>
    %cst_27 = arith.constant 0.000000e+00 : f32
    %89 = vector.shape_cast %54 : vector<1x1x1xf32> to vector<1x1x1xf32>
    %90 = vector.broadcast %89 : vector<1x1x1xf32> to vector<1x1x128xf32>
    %91 = vector.broadcast %cst_27 : f32 to vector<1x1x128xf32>
    %92 = arith.select %88, %90, %91 : vector<1x1x128xi1>, vector<1x1x128xf32>
    %93 = arith.addf %86, %92 : vector<1x1x128xf32>
    %c2_i32 = arith.constant 2 : i32
    %94 = vector.broadcast %c2_i32 : i32 to vector<1x1x128xi32>
    %95 = arith.cmpi eq, %80, %94 : vector<1x1x128xi32>
    %cst_28 = arith.constant 0.000000e+00 : f32
    %96 = vector.shape_cast %79 : vector<1x1x1xf32> to vector<1x1x1xf32>
    %97 = vector.broadcast %96 : vector<1x1x1xf32> to vector<1x1x128xf32>
    %98 = vector.broadcast %cst_28 : f32 to vector<1x1x128xf32>
    %99 = arith.select %95, %97, %98 : vector<1x1x128xi1>, vector<1x1x128xf32>
    %100 = arith.addf %93, %99 : vector<1x1x128xf32>
    %c0_29 = arith.constant 0 : index
    %c0_30 = arith.constant 0 : index
    %c0_31 = arith.constant 0 : index
    %101 = vector.load %arg6[%c0_29, %c0_30, %c0_31] : memref<1x1x128xf32, #tpu.memory_space<vmem>>, vector<1x1x128xf32>
    tpu.vector_store %arg6[%c0_29, %c0_30, %c0_31], %100 {strides = array<i32>} : memref<1x1x128xf32, #tpu.memory_space<vmem>>, vector<1x1x128xf32>,
    return
  }
  func.func @transform_0(%arg0: i32) -> (i32, i32, i32) {
    %c0_i32 = arith.constant 0 : i32
    %c0_i32_0 = arith.constant 0 : i32
    %c0_i32_1 = arith.constant 0 : i32
    return %arg0, %c0_i32, %c0_i32_0 : i32, i32, i32
  }
  func.func @transform_1(%arg0: i32) -> (i32, i32, i32) {
    %c0_i32 = arith.constant 0 : i32
    %c0_i32_0 = arith.constant 0 : i32
    %c0_i32_1 = arith.constant 0 : i32
    return %arg0, %c0_i32, %c0_i32_0 : i32, i32, i32
  }
  func.func @transform_2(%arg0: i32) -> (i32, i32, i32) {
    %c0_i32 = arith.constant 0 : i32
    %c0_i32_0 = arith.constant 0 : i32
    %c0_i32_1 = arith.constant 0 : i32
    return %arg0, %c0_i32, %c0_i32_0 : i32, i32, i32
  }
  func.func @transform_3(%arg0: i32) -> (i32, i32, i32) {
    %c0_i32 = arith.constant 0 : i32
    %c0_i32_0 = arith.constant 0 : i32
    %c0_i32_1 = arith.constant 0 : i32
    return %arg0, %c0_i32, %c0_i32_0 : i32, i32, i32
  }
  func.func @transform_4(%arg0: i32) -> (i32, i32, i32) {
    %c0_i32 = arith.constant 0 : i32
    %c0_i32_0 = arith.constant 0 : i32
    %c0_i32_1 = arith.constant 0 : i32
    return %arg0, %c0_i32, %c0_i32_0 : i32, i32, i32
  }
  func.func @transform_5(%arg0: i32) -> (i32, i32, i32) {
    %c0_i32 = arith.constant 0 : i32
    %c0_i32_0 = arith.constant 0 : i32
    %c0_i32_1 = arith.constant 0 : i32
    return %arg0, %c0_i32, %c0_i32_0 : i32, i32, i32
  }
}

</mosaic_0001>

<llo_original>
// kernel: tpu_custom_call.1
$region0: #{tpu_custom_call.1}
  #allocation0 [shape = 'u32[]', space=smem, size = 0x4, offset = 0x4, fixed_abs, tag = 'smem constant byte address 0x4 - core index']
  #allocation1 [shape = 'u32[144,128]{1,0:T(1,128)}', space=vmem, size = 0x12000, scoped, tag = 'internal scratch']
  %s0 = inlined_call_operand.hbm [shape: f32[2,8,203], index: 0, kind: input, shape index: {}]
  %s1 = inlined_call_operand.hbm [shape: f32[2,8,203], index: 1, kind: input, shape index: {}]
  %s2 = inlined_call_operand.vmem [shape: f32[2,8,18], index: 2, kind: input, shape index: {}]
  %s3 = inlined_call_operand.vmem [shape: f32[2,7,7], index: 3, kind: input, shape index: {}]
  %s4 = inlined_call_operand.vmem [shape: f32[2,1,25], index: 4, kind: input, shape index: {}]
  %s5 = inlined_call_operand.hbm [shape: f32[2,1,128], index: 5, kind: output, shape index: {}]
  %s6 = sld [smem:[#allocation0]]
  $region61: #{tpu_custom_call.1} parent=0
    _
  %s8 = ssub.s32 1, %s6
  %s9 = scalar_select 0, %s8, %s6
  $region1: #{tpu_custom_call.1} parent=0
    #allocation2 [shape = 'u8[16384]{0}', space=vmem, size = 0x4000, scoped, tag = 'input window, operand 0']
    #allocation3 [shape = 's32[2]{0}', space=sflag, size = 0x8, scoped, tag = 'scoped memory for tpu_custom_call.1']
    #allocation4 [shape = 's32[2]{0}', space=sflag, size = 0x8, scoped, tag = 'scoped memory for tpu_custom_call.1']
    #allocation5 [shape = 'u8[16384]{0}', space=vmem, size = 0x4000, scoped, tag = 'input window, operand 1']
    #allocation6 [shape = 's32[2]{0}', space=sflag, size = 0x8, scoped, tag = 'scoped memory for tpu_custom_call.1']
    #allocation7 [shape = 'u8[1024]{0}', space=vmem, size = 0x400, scoped, tag = 'output window, operand 0']
    %10 = vsyncpa [#allocation3], 0
    %s11 = scalar_lea.sflag [#allocation3], 1
    %12 = vsyncpa %s11, 0
    %13 = vsyncpa [#allocation6], 0
    %s14 = scalar_lea.sflag [#allocation6], 1
    %15 = vsyncpa %s14, 0
    %16 = vsyncpa [#allocation4], 0
    %s17 = scalar_lea.sflag [#allocation4], 1
    %18 = vsyncpa %s17, 0
    loop: start=0, step=1, limit=4
    $region2: #{tpu_custom_call.1} parent=1 // loop_pre_header
      _
    $region3: #{tpu_custom_call.1} parent=1 // loop_header
      %s20 = sphi 0, %s24
      %p21 = scmp.ge.s32.totalorder %s20, 4
      %s30 = sphi 0, %s32
      %s33 = sphi 0, %s30
      %s34 = sphi 0, %s33
      %s50 = sphi 0, %s34
      %s56 = sphi 0, %s58
      %s59 = sphi 0, %s56
      %s60 = sphi 0, %s59
      %s76 = sphi 0, %s60
      %s82 = sphi 0, %s84
      %s85 = sphi 0, %s82
      %s86 = sphi 0, %s85
      %s102 = sphi 0, %s86
      %s108 = sphi 0, %s110
      %s111 = sphi 0, %s108
      %s112 = sphi 0, %s111
      %s128 = sphi 0, %s112
      %s134 = sphi 0, %s136
      %s137 = sphi 0, %s134
      %s138 = sphi 0, %s137
      %s154 = sphi 0, %s138
      %s160 = sphi 0, %s162
      %s163 = sphi 0, %s160
      %s164 = sphi 0, %s163
      %s180 = sphi 0, %s164
    $region4: #{tpu_custom_call.1} parent=1 // loop_header_branch
      %23 = sbr.rel (%p21) target = $region8
    $region5: #{tpu_custom_call.1} parent=1 // loop_body
      %s25 = ssub.s32 %s20, 1
      %s26 = ssub.s32 %s20, 2
      %s27 = sadd.s32 %s20, 1
      %s28 = ssub.s32 %s20, %s27
      %p29 = scmp.eq.s32.totalorder %s28, 0
      %s31 = sadd.s32 %s30, 1
      %s32 = scalar_select %p29, %s30, %s31
      %p35 = pneg %p29
      %p36 = scmp.eq.s32.totalorder %s20, 1
      %p37 = por %p35, %p36
      %p38 = scmp.ne.s32.totalorder %s30, %s33
      %p39 = scmp.eq.s32.totalorder %s20, 0
      %p40 = por %p38, %p39
      %p41 = scmp.ne.s32.totalorder %s30, %s33
      %p42 = scmp.eq.s32.totalorder %s25, 1
      %p43 = por %p41, %p42
      %p44 = scmp.ne.s32.totalorder %s33, %s34
      %p45 = scmp.eq.s32.totalorder %s25, 0
      %p46 = por %p44, %p45
      %p47 = scmp.ne.s32.totalorder %s33, %s34
      %p48 = scmp.eq.s32.totalorder %s26, 1
      %p49 = por %p47, %p48
      %p51 = scmp.ne.s32.totalorder %s34, %s50
      %p52 = scmp.eq.s32.totalorder %s26, 0
      %p53 = por %p51, %p52
      %s54 = ssub.s32 %s20, %s27
      %p55 = scmp.eq.s32.totalorder %s54, 0
      %s57 = sadd.s32 %s56, 1
      %s58 = scalar_select %p55, %s56, %s57
      %p61 = pneg %p55
      %p62 = scmp.eq.s32.totalorder %s20, 1
      %p63 = por %p61, %p62
      %p64 = scmp.ne.s32.totalorder %s56, %s59
      %p65 = scmp.eq.s32.totalorder %s20, 0
      %p66 = por %p64, %p65
      %p67 = scmp.ne.s32.totalorder %s56, %s59
      %p68 = scmp.eq.s32.totalorder %s25, 1
      %p69 = por %p67, %p68
      %p70 = scmp.ne.s32.totalorder %s59, %s60
      %p71 = scmp.eq.s32.totalorder %s25, 0
      %p72 = por %p70, %p71
      %p73 = scmp.ne.s32.totalorder %s59, %s60
      %p74 = scmp.eq.s32.totalorder %s26, 1
      %p75 = por %p73, %p74
      %p77 = scmp.ne.s32.totalorder %s60, %s76
      %p78 = scmp.eq.s32.totalorder %s26, 0
      %p79 = por %p77, %p78
      %s80 = ssub.s32 %s20, %s27
      %p81 = scmp.eq.s32.totalorder %s80, 0
      %s83 = sadd.s32 %s82, 1
      %s84 = scalar_select %p81, %s82, %s83
      %p87 = pneg %p81
      %p88 = scmp.eq.s32.totalorder %s20, 1
      %p89 = por %p87, %p88
      %p90 = scmp.ne.s32.totalorder %s82, %s85
      %p91 = scmp.eq.s32.totalorder %s20, 0
      %p92 = por %p90, %p91
      %p93 = scmp.ne.s32.totalorder %s82, %s85
      %p94 = scmp.eq.s32.totalorder %s25, 1
      %p95 = por %p93, %p94
      %p96 = scmp.ne.s32.totalorder %s85, %s86
      %p97 = scmp.eq.s32.totalorder %s25, 0
      %p98 = por %p96, %p97
      %p99 = scmp.ne.s32.totalorder %s85, %s86
      %p100 = scmp.eq.s32.totalorder %s26, 1
      %p101 = por %p99, %p100
      %p103 = scmp.ne.s32.totalorder %s86, %s102
      %p104 = scmp.eq.s32.totalorder %s26, 0
      %p105 = por %p103, %p104
      %s106 = ssub.s32 %s20, %s27
      %p107 = scmp.eq.s32.totalorder %s106, 0
      %s109 = sadd.s32 %s108, 1
      %s110 = scalar_select %p107, %s108, %s109
      %p113 = pneg %p107
      %p114 = scmp.eq.s32.totalorder %s20, 1
      %p115 = por %p113, %p114
      %p116 = scmp.ne.s32.totalorder %s108, %s111
      %p117 = scmp.eq.s32.totalorder %s20, 0
      %p118 = por %p116, %p117
      %p119 = scmp.ne.s32.totalorder %s108, %s111
      %p120 = scmp.eq.s32.totalorder %s25, 1
      %p121 = por %p119, %p120
      %p122 = scmp.ne.s32.totalorder %s111, %s112
      %p123 = scmp.eq.s32.totalorder %s25, 0
      %p124 = por %p122, %p123
      %p125 = scmp.ne.s32.totalorder %s111, %s112
      %p126 = scmp.eq.s32.totalorder %s26, 1
      %p127 = por %p125, %p126
      %p129 = scmp.ne.s32.totalorder %s112, %s128
      %p130 = scmp.eq.s32.totalorder %s26, 0
      %p131 = por %p129, %p130
      %s132 = ssub.s32 %s20, %s27
      %p133 = scmp.eq.s32.totalorder %s132, 0
      %s135 = sadd.s32 %s134, 1
      %s136 = scalar_select %p133, %s134, %s135
      %p139 = pneg %p133
      %p140 = scmp.eq.s32.totalorder %s20, 1
      %p141 = por %p139, %p140
      %p142 = scmp.ne.s32.totalorder %s134, %s137
      %p143 = scmp.eq.s32.totalorder %s20, 0
      %p144 = por %p142, %p143
      %p145 = scmp.ne.s32.totalorder %s134, %s137
      %p146 = scmp.eq.s32.totalorder %s25, 1
      %p147 = por %p145, %p146
      %p148 = scmp.ne.s32.totalorder %s137, %s138
      %p149 = scmp.eq.s32.totalorder %s25, 0
      %p150 = por %p148, %p149
      %p151 = scmp.ne.s32.totalorder %s137, %s138
      %p152 = scmp.eq.s32.totalorder %s26, 1
      %p153 = por %p151, %p152
      %p155 = scmp.ne.s32.totalorder %s138, %s154
      %p156 = scmp.eq.s32.totalorder %s26, 0
      %p157 = por %p155, %p156
      %s158 = ssub.s32 %s20, %s27
      %p159 = scmp.eq.s32.totalorder %s158, 0
      %s161 = sadd.s32 %s160, 1
      %s162 = scalar_select %p159, %s160, %s161
      %p165 = pneg %p159
      %p166 = scmp.eq.s32.totalorder %s20, 1
      %p167 = por %p165, %p166
      %p168 = scmp.ne.s32.totalorder %s160, %s163
      %p169 = scmp.eq.s32.totalorder %s20, 0
      %p170 = por %p168, %p169
      %p171 = scmp.ne.s32.totalorder %s160, %s163
      %p172 = scmp.eq.s32.totalorder %s25, 1
      %p173 = por %p171, %p172
      %p174 = scmp.ne.s32.totalorder %s163, %s164
      %p175 = scmp.eq.s32.totalorder %s25, 0
      %p176 = por %p174, %p175
      %p177 = scmp.ne.s32.totalorder %s163, %s164
      %p178 = scmp.eq.s32.totalorder %s26, 1
      %p179 = por %p177, %p178
      %p181 = scmp.ne.s32.totalorder %s164, %s180
      %p182 = scmp.eq.s32.totalorder %s26, 0
      %p183 = por %p181, %p182
      %p184 = scmp.le.s32.totalorder 1, %s20
      %p185 = scmp.lt.s32.totalorder %s20, 3
      %p186 = pnand %p184, %p185
      %p187 = pneg %p186
      // Predicated region
      $region9: #{tpu_custom_call.1} parent=5 // pred_check
        _
      $region10: #{tpu_custom_call.1} parent=5 // pred_check_branch
        %189 = sbr.rel (%p186) target = $region12
      $region11: #{tpu_custom_call.1} parent=5 // pred_region
        %s190 = ssub.s32 %s20, 1
      $region12: #{tpu_custom_call.1} parent=5 // pred_fallthru
        _
      %p191 = scmp.lt.s32.totalorder %s20, 2
      // Predicated region
      $region13: #{tpu_custom_call.1} parent=5 // pred_check
        %p192 = pneg %p191
      $region14: #{tpu_custom_call.1} parent=5 // pred_check_branch
        %194 = sbr.rel (%p192) target = $region16
      $region15: #{tpu_custom_call.1} parent=5 // pred_region
        // Predicated region
        $region17: #{tpu_custom_call.1} parent=15 // pred_check
          %p195 = pneg %p40
        $region18: #{tpu_custom_call.1} parent=15 // pred_check_branch
          %197 = sbr.rel (%p195) target = $region20
        $region19: #{tpu_custom_call.1} parent=15 // pred_region
          %s198 = sand.u32 %s30, 1
          %s199 = scalar_lea.sflag [#allocation3], %s198
          %s200 = sand.u32 %s30, 1
          %s201 = smul.addr %s200, 16
          %s202 = scalar_lea.vmem [#allocation2], %s201
          %s204 = ssub.s32 256, 256
          %205 = vsyncadd %s199, %s204
          %s206 = smul.addr %s20, 2
          %s207 = smul.addr %s206, 128
          %s208 = scalar_lea.hbm %s0, %s207
          %s210 = sshll.u32 %s202, 4
          %s211 = int_to_ptr.vmem [resolvable:$true] %s210
          %213 = dma.hbm_to_vmem [thread:$0]  %s208, 256, %s211, %s199
        $region20: #{tpu_custom_call.1} parent=15 // pred_fallthru
          _
        // Predicated region
        $region21: #{tpu_custom_call.1} parent=15 // pred_check
          %p214 = pneg %p66
        $region22: #{tpu_custom_call.1} parent=15 // pred_check_branch
          %216 = sbr.rel (%p214) target = $region24
        $region23: #{tpu_custom_call.1} parent=15 // pred_region
          %s217 = sand.u32 %s56, 1
          %s218 = scalar_lea.sflag [#allocation6], %s217
          %s219 = sand.u32 %s56, 1
          %s220 = smul.addr %s219, 16
          %s221 = scalar_lea.vmem [#allocation5], %s220
          %s223 = ssub.s32 256, 256
          %224 = vsyncadd %s218, %s223
          %s225 = smul.addr %s20, 2
          %s226 = smul.addr %s225, 128
          %s227 = scalar_lea.hbm %s1, %s226
          %s229 = sshll.u32 %s221, 4
          %s230 = int_to_ptr.vmem [resolvable:$true] %s229
          %232 = dma.hbm_to_vmem [thread:$0]  %s227, 256, %s230, %s218
        $region24: #{tpu_custom_call.1} parent=15 // pred_fallthru
          _
        // Predicated region
        $region25: #{tpu_custom_call.1} parent=15 // pred_check
          %p233 = pneg %p92
        $region26: #{tpu_custom_call.1} parent=15 // pred_check_branch
          %235 = sbr.rel (%p233) target = $region28
        $region27: #{tpu_custom_call.1} parent=15 // pred_region
          %p236 = scmp.lt.s32.totalorder %s20, 1
          %s237 = scalar_select %p236, %s20, 1
          %s238 = smul.addr %s237, 8
          %s239 = scalar_lea.vmem %s2, %s238
        $region28: #{tpu_custom_call.1} parent=15 // pred_fallthru
          _
        // Predicated region
        $region29: #{tpu_custom_call.1} parent=15 // pred_check
          %p240 = pneg %p118
        $region30: #{tpu_custom_call.1} parent=15 // pred_check_branch
          %242 = sbr.rel (%p240) target = $region32
        $region31: #{tpu_custom_call.1} parent=15 // pred_region
          %p243 = scmp.lt.s32.totalorder %s20, 1
          %s244 = scalar_select %p243, %s20, 1
          %s245 = smul.addr %s244, 8
          %s246 = scalar_lea.vmem %s3, %s245
        $region32: #{tpu_custom_call.1} parent=15 // pred_fallthru
          _
        // Predicated region
        $region33: #{tpu_custom_call.1} parent=15 // pred_check
          %p247 = pneg %p144
        $region34: #{tpu_custom_call.1} parent=15 // pred_check_branch
          %249 = sbr.rel (%p247) target = $region36
        $region35: #{tpu_custom_call.1} parent=15 // pred_region
          %p250 = scmp.lt.s32.totalorder %s20, 1
          %s251 = scalar_select %p250, %s20, 1
          %s252 = scalar_lea.vmem %s4, %s251
        $region36: #{tpu_custom_call.1} parent=15 // pred_fallthru
          _
      $region16: #{tpu_custom_call.1} parent=5 // pred_fallthru
        _
      %p253 = scmp.le.s32.totalorder 1, %s20
      %p254 = scmp.lt.s32.totalorder %s20, 3
      %p255 = pnand %p253, %p254
      %p256 = pneg %p255
      // Predicated region
      $region37: #{tpu_custom_call.1} parent=5 // pred_check
        _
      $region38: #{tpu_custom_call.1} parent=5 // pred_check_branch
        %258 = sbr.rel (%p255) target = $region40
      $region39: #{tpu_custom_call.1} parent=5 // pred_region
        %s259 = ssub.s32 %s20, 1
        %s260 = sand.u32 %s33, 1
        %s261 = scalar_lea.sflag [#allocation3], %s260
        %s262 = sand.u32 %s33, 1
        %s263 = smul.addr %s262, 16
        %s264 = scalar_lea.vmem [#allocation2], %s263
        // Predicated region
        $region41: #{tpu_custom_call.1} parent=39 // pred_check
          %p265 = pneg %p46
        $region42: #{tpu_custom_call.1} parent=39 // pred_check_branch
          %267 = sbr.rel (%p265) target = $region44
        $region43: #{tpu_custom_call.1} parent=39 // pred_region
          %268 = dma.done %s261, 256
        $region44: #{tpu_custom_call.1} parent=39 // pred_fallthru
          _
        %s269 = sand.u32 %s59, 1
        %s270 = scalar_lea.sflag [#allocation6], %s269
        %s271 = sand.u32 %s59, 1
        %s272 = smul.addr %s271, 16
        %s273 = scalar_lea.vmem [#allocation5], %s272
        // Predicated region
        $region45: #{tpu_custom_call.1} parent=39 // pred_check
          %p274 = pneg %p72
        $region46: #{tpu_custom_call.1} parent=39 // pred_check_branch
          %276 = sbr.rel (%p274) target = $region48
        $region47: #{tpu_custom_call.1} parent=39 // pred_region
          %277 = dma.done %s270, 256
        $region48: #{tpu_custom_call.1} parent=39 // pred_fallthru
          _
        %s278 = sand.u32 %s33, 1
        %s279 = scalar_lea.sflag [#allocation3], %s278
        %s280 = sand.u32 %s33, 1
        %s281 = smul.addr %s280, 16
        %s282 = scalar_lea.vmem [#allocation2], %s281
        %p283 = pneg %p46
        %p284 = pneg %p43
        %s285 = sand.u32 %s59, 1
        %s286 = scalar_lea.sflag [#allocation6], %s285
        %s287 = sand.u32 %s59, 1
        %s288 = smul.addr %s287, 16
        %s289 = scalar_lea.vmem [#allocation5], %s288
        %p290 = pneg %p72
        %p291 = pneg %p69
        %p292 = scmp.lt.s32.totalorder %s25, 1
        %s293 = scalar_select %p292, %s25, 1
        %s294 = smul.addr %s293, 8
        %s295 = scalar_lea.vmem %s2, %s294
        %p296 = pneg %p98
        %p297 = pneg %p95
        %p298 = scmp.lt.s32.totalorder %s25, 1
        %s299 = scalar_select %p298, %s25, 1
        %s300 = smul.addr %s299, 8
        %s301 = scalar_lea.vmem %s3, %s300
        %p302 = pneg %p124
        %p303 = pneg %p121
        %p304 = scmp.lt.s32.totalorder %s25, 1
        %s305 = scalar_select %p304, %s25, 1
        %s306 = scalar_lea.vmem %s4, %s305
        %p307 = pneg %p150
        %p308 = pneg %p147
        %p309 = pneg %p176
        %p310 = pneg %p173
        %s311 = sand.u32 %s163, 1
        %s312 = scalar_lea.sflag [#allocation4], %s311
        %s313 = sand.u32 %s163, 1
        %s314 = scalar_lea.vmem [#allocation7], %s313
        %p315 = scmp.lt.s32.totalorder %s25, 1
        %s316 = scalar_select %p315, %s25, 1
        %s317 = smul.addr %s316, 8
        %s318 = scalar_lea.vmem %s2, %s317
        %p319 = scmp.lt.s32.totalorder %s25, 1
        %s320 = scalar_select %p319, %s25, 1
        %s321 = smul.addr %s320, 8
        %s322 = scalar_lea.vmem %s3, %s321
        %p323 = scmp.lt.s32.totalorder %s25, 1
        %s324 = scalar_select %p323, %s25, 1
        %s325 = scalar_lea.vmem %s4, %s324
        %v326 = vld [vmem:[%s264] sm:$0xff]
        %v327 = vld [vmem:[%s264 + $0x8] sm:$0xff]
        %v328 = vld [vmem:[%s273] sm:$0xff]
        %v329 = vld [vmem:[%s273 + $0x8] sm:$0xff]
        %v330 = vlaneseq
        %v331 = vand.u32 %v330, 127
        %v332 = vadd.s32 %v331, 128
        %vm333 = vcmp.lt.s32.totalorder %v331, 201
        %vm334 = vcmp.lt.s32.totalorder %v332, 201
        %v335 = vsub.f32 %v326, %v328
        %v336 = vsub.f32 %v327, %v329
        %v337 = vsel %vm333, 1, 0
        %v338 = vsel %vm334, 1, 0
        %vm339 = vcmp.eq.s32.totalorder %v337, 1
        %vm340 = vcmp.eq.s32.totalorder %v338, 1
        %v341 = vsel %vm339, %v335, 0.0
        %v342 = vsel %vm340, %v336, 0.0
        %v345 = vrot.slane %v341, 7
        %v346 = vrot.slane %v342, 7
        %v349 = vsub.f32 %v341, %v345
        %v350 = vsub.f32 %v342, %v346
        %v351 = vmul.f32 %v349, %v349
        %v352 = vmul.f32 %v350, %v350
        %vm353 = vcmask 1047553
        %v354 = vsel %vm353, %v351, 0.0
        %vm355 = vcmask 613377
        %v356 = vsel %vm355, %v352, 0.0
        %v357 = vadd.f32 %v354, %v356
        %358 = vadd.xlane.f32.xlu0 %v357
        %v359 = vpop.xlane.xlu0 %358
        %v360 = vmul.f32 %v359, 0.0049751243
        %v361 = vld [vmem:[%s322] sm:$0x7f]
        %vm362 = vcmask 55344
        %v363 = vsel %vm362, %v361, 0.0
        %v364 = vrot.slane %v363, 4
        %v365 = vadd.f32 %v363, %v364
        %v366 = vrot.slane %v365, 2
        %v367 = vadd.f32 %v365, %v366
        %v368 = vrot.slane %v367, 1
        %v369 = vadd.f32 %v367, %v368
        %v370 = vadd.f32 %v369, 1e-07
        %v371 = vrcp.pop %v370
        %v373 = vrot.slane %v361, 7
        %374 = vrot.lane.b32.xlu0 %v373, 122
        %v375 = vpop.permute.xlu0 %374
        %v377 = vmul.f32 %v360, %v375
        %v379 = vrot.slane %v377, 1
        %vm381 = vcmask 6144
        %v382 = vsel %vm381, %v379, 0.0
        %v383 = vrot.slane %v382, 4
        %v384 = vadd.f32 %v382, %v383
        %v385 = vrot.slane %v384, 2
        %v386 = vadd.f32 %v384, %v385
        %v387 = vrot.slane %v386, 1
        %v388 = vadd.f32 %v386, %v387
        %390 = vrot.lane.b32.xlu0 %v371, 122
        %v391 = vpop.permute.xlu0 %390
        %v393 = vmul.f32 %v388, %v391
        %v394 = vld [vmem:[%s318] sm:$0xff]
        %v396 = vrot.slane %v394, 7
        %v398 = vsub.f32 %v394, %v396
        %v399 = vmul.f32 %v398, %v398
        %401 = vrot.lane.b32.xlu0 %v399, 122
        %v402 = vpop.permute.xlu0 %401
        %v404 = vadd.f32 %v399, %v402
        %405 = vrot.lane.b32.xlu0 %v399, 116
        %v406 = vpop.permute.xlu0 %405
        %v408 = vadd.f32 %v404, %v406
        %v409 = vmul.f32 %v408, 0.33333334
        %vm410 = vcmask 47104
        %v411 = vsel %vm410, %v361, 0.0
        %412 = vadd.xlane.f32.xlu0 %v411
        %v413 = vpop.xlane.xlu0 %412
        %v414 = vadd.f32 %v413, 1e-07
        %v415 = vrcp.pop %v414
        %v417 = vmul.f32 %v409, %v373
        %vm418 = vcmask 48129
        %v419 = vsel %vm418, %v417, 0.0
        %420 = vadd.xlane.f32.xlu0 %v419
        %v421 = vpop.xlane.xlu0 %420
        %v423 = vrot.slane %v415, 7
        %v425 = vmul.f32 %v421, %v423
        %v426 = vmul.f32 %v425, %v375
        %v428 = vrot.slane %v426, 1
        %v430 = vsel %vm381, %v428, 0.0
        %v431 = vrot.slane %v430, 4
        %v432 = vadd.f32 %v430, %v431
        %v433 = vrot.slane %v432, 2
        %v434 = vadd.f32 %v432, %v433
        %v435 = vrot.slane %v434, 1
        %v436 = vadd.f32 %v434, %v435
        %v437 = vmul.f32 %v436, %v391
        %v438 = vld [vmem:[%s325] sm:$0x1]
        %v440 = vlaneseq
        %v441 = vshrl.u32 %v440, 7
        %v442 = vsub.s32 0, %v441
        %v443 = vrot.slane %v438, %v442
        %v445 = vmul.f32 %v394, %v443
        %447 = vrot.lane.b32.xlu0 %v445, 122
        %v448 = vpop.permute.xlu0 %447
        %v450 = vadd.f32 %v445, %v448
        %451 = vrot.lane.b32.xlu0 %v445, 116
        %v452 = vpop.permute.xlu0 %451
        %v454 = vadd.f32 %v450, %v452
        %455 = vset.pattern.permute.xlu0 24
        %456 = vperm.xlu0 %455, %v443
        %v457 = vpop.permute.xlu0 %456
        %v459 = vadd.f32 %v454, %v457
        %460 = vrot.lane.b32.xlu0 %v443, 110
        %v461 = vpop.permute.xlu0 %460
        %v463 = vsub.f32 %v459, %v461
        %v464 = vmul.f32 %v463, %v463
        %v465 = vmul.f32 %v464, %v361
        %v466 = vsel %vm410, %v465, 0.0
        %467 = vadd.xlane.f32.xlu0 %v466
        %v468 = vpop.xlane.xlu0 %467
        %v469 = vmul.f32 %v468, %v415
        %v470 = vmul.f32 %v469, %v361
        %v471 = vsel %vm362, %v470, 0.0
        %v472 = vrot.slane %v471, 4
        %v473 = vadd.f32 %v471, %v472
        %v474 = vrot.slane %v473, 2
        %v475 = vadd.f32 %v473, %v474
        %v476 = vrot.slane %v475, 1
        %v477 = vadd.f32 %v475, %v476
        %v478 = vmul.f32 %v477, %v371
        %vm479 = vcmp.eq.s32.totalorder %v331, 0
        %481 = vset.pattern.permute.xlu0 0
        %482 = vperm.xlu0 %481, %v393
        %v483 = vpop.permute.xlu0 %482
        %v485 = vsel %vm479, %v483, 0.0
        %vm486 = vcmp.eq.s32.totalorder %v331, 1
        %488 = vset.pattern.permute.xlu0 0
        %489 = vperm.xlu0 %488, %v437
        %v490 = vpop.permute.xlu0 %489
        %v492 = vsel %vm486, %v490, 0.0
        %v493 = vadd.f32 %v485, %v492
        %vm494 = vcmp.eq.s32.totalorder %v331, 2
        %496 = vset.pattern.permute.xlu0 6
        %497 = vperm.xlu0 %496, %v478
        %v498 = vpop.permute.xlu0 %497
        %v500 = vsel %vm494, %v498, 0.0
        %v501 = vadd.f32 %v493, %v500
        %502 = vst [vmem:[%s314] sm:$0x1] %v501
        %s503 = sand.u32 %s163, 1
        %s504 = scalar_lea.sflag [#allocation4], %s503
        %s505 = sand.u32 %s163, 1
        %s506 = scalar_lea.vmem [#allocation7], %s505
        // Predicated region
        $region49: #{tpu_custom_call.1} parent=39 // pred_check
          %p507 = pneg %p173
        $region50: #{tpu_custom_call.1} parent=39 // pred_check_branch
          %509 = sbr.rel (%p507) target = $region52
        $region51: #{tpu_custom_call.1} parent=39 // pred_region
          %s511 = ssub.s32 16, 16
          %512 = vsyncadd %s504, %s511
          %s513 = smul.addr %s25, 16
          %s514 = scalar_lea.hbm %s5, %s513
          %s516 = sshll.u32 %s506, 4
          %s517 = int_to_ptr.vmem [resolvable:$true] %s516
          %519 = dma.vmem_to_hbm [thread:$0]  %s517, 16, %s514, %s504
        $region52: #{tpu_custom_call.1} parent=39 // pred_fallthru
          _
      $region40: #{tpu_custom_call.1} parent=5 // pred_fallthru
        _
      %p520 = scmp.le.s32.totalorder 2, %s20
      // Predicated region
      $region53: #{tpu_custom_call.1} parent=5 // pred_check
        %p521 = pneg %p520
      $region54: #{tpu_custom_call.1} parent=5 // pred_check_branch
        %523 = sbr.rel (%p521) target = $region56
      $region55: #{tpu_custom_call.1} parent=5 // pred_region
        %s524 = ssub.s32 %s20, 2
        // Predicated region
        $region57: #{tpu_custom_call.1} parent=55 // pred_check
          %p525 = pneg %p179
        $region58: #{tpu_custom_call.1} parent=55 // pred_check_branch
          %527 = sbr.rel (%p525) target = $region60
        $region59: #{tpu_custom_call.1} parent=55 // pred_region
          %s528 = sand.u32 %s164, 1
          %s529 = scalar_lea.sflag [#allocation4], %s528
          %s530 = sand.u32 %s164, 1
          %s531 = scalar_lea.vmem [#allocation7], %s530
          %532 = dma.done %s529, 16
        $region60: #{tpu_custom_call.1} parent=55 // pred_fallthru
          _
      $region56: #{tpu_custom_call.1} parent=5 // pred_fallthru
        _
    $region6: #{tpu_custom_call.1} parent=1 // loop_footer
      %s24 = sadd.s32 1, %s20
    $region7: #{tpu_custom_call.1} parent=1 // loop_footer_branch
      %19 = sbr.rel target = $region3
    $region8: #{tpu_custom_call.1} parent=1 // loop_exit
      _
    %533 = vsyncpa [#allocation3], 1
    %s534 = scalar_lea.sflag [#allocation3], 1
    %535 = vsyncpa %s534, 1
    %536 = vsyncpa [#allocation6], 1
    %s537 = scalar_lea.sflag [#allocation6], 1
    %538 = vsyncpa %s537, 1
    %539 = vsyncpa [#allocation4], 1
    %s540 = scalar_lea.sflag [#allocation4], 1
    %541 = vsyncpa %s540, 1

</llo_original>
